<compile_context>
chip_gen: v5e
topology: v5e:2x2
jax: 0.10.0
libtpu: 0.0.40
codegen_flags: <defaults>
</compile_context>

<pallas_src>
import functools
import math

import jax
import jax.numpy as jnp
from jax.experimental import pallas as pl
from jax.experimental.pallas import tpu as pltpu


def _round_up(x: int, m: int) -> int:
    return (x + m - 1) // m * m


def _batch_tiling(B: int, block_b: int, min_blocks: int = 1, sublane: int = 8):
    """Rebalanced batch tiling.

    Chooses the number of row-blocks first, then the smallest sublane-aligned
    tile that covers B, so padding waste is < sublane*n rows instead of up to a
    full block (e.g. B=300, block 256: pads to 304, not 512).  `min_blocks=2`
    guarantees both v7x TensorCores receive grid steps once B is large enough.
    """
    n = -(-B // block_b)
    if min_blocks > 1 and B >= sublane * min_blocks:
        n = max(n, min_blocks)
    tb = _round_up(-(-B // n), sublane)
    b_pad = n * tb
    return n, tb, b_pad


def _mlp_body(x, w1_ref, b1_ref, w2_ref, b2_ref, o_ref, mxu_dtype):
    """Shared linear_1 -> SiLU -> linear_2 body (x already loaded, f32-ish)."""
    # linear_1: K (= in_channels) is tiny; keep it in the input precision so
    # timestep features are not truncated.  f32 accumulation on the MXU.
    h = jnp.dot(x, w1_ref[...].astype(x.dtype), preferred_element_type=jnp.float32)
    h = h + b1_ref[...]                      # (1, H) f32 bias row, broadcast
    # SiLU = x * sigmoid(x), f32 on VPU + EUP (safe on v5e: no bf16 elementwise).
    h = h * jax.nn.sigmoid(h)
    # linear_2: cast operands to the MXU dtype in-kernel (VPU cast hides under
    # the MXU); f32 accumulation.
    h = h.astype(mxu_dtype)
    out = jnp.dot(h, w2_ref[...].astype(mxu_dtype), preferred_element_type=jnp.float32)
    out = out + b2_ref[...]
    o_ref[...] = out.astype(o_ref.dtype)


def _timestep_embedding_kernel(x_ref, w1_ref, b1_ref, w2_ref, b2_ref, o_ref, *,
                               mxu_dtype):
    _mlp_body(x_ref[...], w1_ref, b1_ref, w2_ref, b2_ref, o_ref, mxu_dtype)


def _fused_timesteps_kernel(t_ref, freq_ref, sinmask_ref, w1_ref, b1_ref,
                            w2_ref, b2_ref, o_ref, *, mxu_dtype):
    # Upstream sinusoidal Timesteps projection fused in: args = t * freq, then
    # arithmetic select between sin/cos halves (no in-kernel concatenate).
    args = t_ref[...] * freq_ref[...]        # (tb,1) * (1,Cin) -> (tb,Cin) f32
    m = sinmask_ref[...]                     # (1, Cin) f32 in {0, 1}
    x = m * jnp.sin(args) + (1.0 - m) * jnp.cos(args)
    _mlp_body(x, w1_ref, b1_ref, w2_ref, b2_ref, o_ref, mxu_dtype)


def _mlp_cost(b_pad, Cin, H, Hout, in_bytes, out_dtype):
    return pl.CostEstimate(
        flops=2 * b_pad * (Cin * H + H * Hout),
        transcendentals=b_pad * H,   # one sigmoid per hidden element
        bytes_accessed=int(in_bytes
                           + (Cin * H + H * Hout + H + Hout) * 4
                           + b_pad * Hout * jnp.dtype(out_dtype).itemsize),
    )


def timestep_embedding(sample, w1, b1, w2, b2, *, block_b=512, min_blocks=1,
                       mxu_dtype=jnp.bfloat16, out_dtype=None):
    """TimestepEmbedding.forward.  sample: [B, Cin]; w1: [Cin, H]; b1: [H];
    w2: [H, Hout]; b2: [Hout] (weights stored [in, out], i.e. x @ W).

    block_b: max rows per grid step (512-1024 suits large-B deployments).
    min_blocks: set 2 on v7x (2 TensorCores) so the parallel batch axis spans
    both cores once B >= ~16.  No wrapper-side dtype casts are performed; pass
    bf16-stored weights for minimum DMA bytes, or f32 and let the kernel cast.
    """
    B, Cin = sample.shape
    H = w1.shape[1]
    Hout = w2.shape[1]
    if out_dtype is None:
        out_dtype = sample.dtype

    n, tb, b_pad = _batch_tiling(B, block_b, min_blocks)
    x_p = sample if b_pad == B else jnp.pad(sample, ((0, b_pad - B), (0, 0)))

    # Biases as (1, D) f32 rows -> lane-aligned 2-D tiles; bias-add stays f32.
    b1_2d = b1.reshape(1, H).astype(jnp.float32)
    b2_2d = b2.reshape(1, Hout).astype(jnp.float32)

    cost = _mlp_cost(b_pad, Cin, H, Hout,
                     in_bytes=b_pad * Cin * sample.dtype.itemsize,
                     out_dtype=out_dtype)

    out = pl.pallas_call(
        functools.partial(_timestep_embedding_kernel, mxu_dtype=mxu_dtype),
        out_shape=jax.ShapeDtypeStruct((b_pad, Hout), out_dtype),
        grid_spec=pltpu.PrefetchScalarGridSpec(
            num_scalar_prefetch=0,
            grid=(n,),
            in_specs=[
                pl.BlockSpec((tb, Cin), lambda i: (i, 0)),   # x rows: pipelined
                pl.BlockSpec((Cin, H), lambda i: (0, 0)),    # weights resident
                pl.BlockSpec((1, H), lambda i: (0, 0)),
                pl.BlockSpec((H, Hout), lambda i: (0, 0)),
                pl.BlockSpec((1, Hout), lambda i: (0, 0)),
            ],
            out_specs=pl.BlockSpec((tb, Hout), lambda i: (i, 0)),
        ),
        compiler_params=pltpu.CompilerParams(
            dimension_semantics=("parallel",),               # megacore-shard batch
        ),
        cost_estimate=cost,
    )(x_p, w1, b1_2d, w2, b2_2d)

    return out[:B] if b_pad != B else out


def timesteps_embedding_fused(timesteps, w1, b1, w2, b2, *,
                              flip_sin_to_cos=True, downscale_freq_shift=0.0,
                              scale=1.0, max_period=10000.0,
                              block_b=512, min_blocks=1,
                              mxu_dtype=jnp.bfloat16, out_dtype=jnp.float32):
    """Fused upstream Timesteps (sinusoidal projection) + TimestepEmbedding MLP.

    timesteps: [B] scalars -> out: [B, Hout].  Cuts the per-call input DMA to
    B floats plus the resident weights and removes one op launch.
    """
    B = timesteps.shape[0]
    Cin = w1.shape[0]
    H = w1.shape[1]
    Hout = w2.shape[1]
    assert Cin % 2 == 0, "sinusoidal embedding dim must be even"
    half = Cin // 2

    # Tiny trace-time constant rows: duplicated frequency vector + sin/cos mask.
    exponent = (-math.log(max_period)
                * jnp.arange(half, dtype=jnp.float32) / (half - downscale_freq_shift))
    emb = scale * jnp.exp(exponent)
    freq_row = jnp.concatenate([emb, emb]).reshape(1, Cin)
    ones, zeros = jnp.ones((half,), jnp.float32), jnp.zeros((half,), jnp.float32)
    sin_mask = (jnp.concatenate([zeros, ones]) if flip_sin_to_cos
                else jnp.concatenate([ones, zeros])).reshape(1, Cin)

    n, tb, b_pad = _batch_tiling(B, block_b, min_blocks)
    t_col = timesteps.astype(jnp.float32).reshape(B, 1)
    if b_pad != B:
        t_col = jnp.pad(t_col, ((0, b_pad - B), (0, 0)))

    b1_2d = b1.reshape(1, H).astype(jnp.float32)
    b2_2d = b2.reshape(1, Hout).astype(jnp.float32)

    cost = _mlp_cost(b_pad, Cin, H, Hout, in_bytes=b_pad * 4, out_dtype=out_dtype)

    out = pl.pallas_call(
        functools.partial(_fused_timesteps_kernel, mxu_dtype=mxu_dtype),
        out_shape=jax.ShapeDtypeStruct((b_pad, Hout), out_dtype),
        grid_spec=pltpu.PrefetchScalarGridSpec(
            num_scalar_prefetch=0,
            grid=(n,),
            in_specs=[
                pl.BlockSpec((tb, 1), lambda i: (i, 0)),     # timesteps column
                pl.BlockSpec((1, Cin), lambda i: (0, 0)),    # freq row (resident)
                pl.BlockSpec((1, Cin), lambda i: (0, 0)),    # sin/cos mask row
                pl.BlockSpec((Cin, H), lambda i: (0, 0)),
                pl.BlockSpec((1, H), lambda i: (0, 0)),
                pl.BlockSpec((H, Hout), lambda i: (0, 0)),
                pl.BlockSpec((1, Hout), lambda i: (0, 0)),
            ],
            out_specs=pl.BlockSpec((tb, Hout), lambda i: (i, 0)),
        ),
        compiler_params=pltpu.CompilerParams(
            dimension_semantics=("parallel",),
        ),
        cost_estimate=cost,
    )(t_col, freq_row, sin_mask, w1, b1_2d, w2, b2_2d)

    return out[:B] if b_pad != B else out


# ----------------------------- references ----------------------------------

def reference_mlp(sample, w1, b1, w2, b2):
    h = sample.astype(jnp.float32) @ w1.astype(jnp.float32) + b1
    h = h * jax.nn.sigmoid(h)
    return h @ w2.astype(jnp.float32) + b2


def reference_sinusoidal(t, dim, flip_sin_to_cos=True, downscale_freq_shift=0.0,
                         scale=1.0, max_period=10000.0):
    half = dim // 2
    exponent = (-math.log(max_period)
                * jnp.arange(half, dtype=jnp.float32) / (half - downscale_freq_shift))
    freqs = jnp.exp(exponent)
    args = scale * t.astype(jnp.float32)[:, None] * freqs[None, :]
    s, c = jnp.sin(args), jnp.cos(args)
    return jnp.concatenate([c, s], -1) if flip_sin_to_cos else jnp.concatenate([s, c], -1)


if __name__ == "__main__":
    key = jax.random.PRNGKey(0)
    k_x, k_w1, k_b1, k_w2, k_b2, k_x2, k_t = jax.random.split(key, 7)

    B = 8                  # batch of timesteps
    in_channels = 32       # sinusoidal timestep projection dim
    time_embed_dim = 128
    out_dim = 128          # out_dim=None in the module -> time_embed_dim

    sample = jax.random.normal(k_x, (B, in_channels), dtype=jnp.float32)
    w1 = jax.random.normal(k_w1, (in_channels, time_embed_dim), jnp.float32) * 0.02
    b1 = jax.random.normal(k_b1, (time_embed_dim,), jnp.float32) * 0.02
    w2 = jax.random.normal(k_w2, (time_embed_dim, out_dim), jnp.float32) * 0.02
    b2 = jax.random.normal(k_b2, (out_dim,), jnp.float32) * 0.02

    ref = reference_mlp(sample, w1, b1, w2, b2)

    # 1) Full-f32 MXU path: tight match against the PyTorch-equivalent reference.
    out_f32 = jax.block_until_ready(
        timestep_embedding(sample, w1, b1, w2, b2, mxu_dtype=jnp.float32))
    assert out_f32.shape == (B, out_dim)
    assert jnp.allclose(out_f32, ref, atol=1e-4, rtol=1e-4), "f32 kernel mismatch"

    # 2) Default path (bf16 second dot on the MXU, f32 accumulation + f32 SiLU).
    out_bf16 = jax.block_until_ready(timestep_embedding(sample, w1, b1, w2, b2))
    assert out_bf16.shape == (B, out_dim)
    assert jnp.allclose(out_bf16, ref, atol=5e-3, rtol=5e-2), "bf16 kernel mismatch"

    # 3) Non-multiple batch with rebalanced tiling + 2 row-blocks (v7x-style):
    #    B=300, block_b=512, min_blocks=2 -> grid=(2,), tile=152, pad 300->304.
    B2 = 300
    sample2 = jax.random.normal(k_x2, (B2, in_channels), dtype=jnp.float32)
    ref2 = reference_mlp(sample2, w1, b1, w2, b2)
    out2 = jax.block_until_ready(
        timestep_embedding(sample2, w1, b1, w2, b2, block_b=512, min_blocks=2))
    assert out2.shape == (B2, out_dim)
    assert jnp.allclose(out2, ref2, atol=5e-3, rtol=5e-2), "batched kernel mismatch"

    # 4) Fused sinusoidal-Timesteps + MLP path (the top perf-review item).
    t = jax.random.uniform(k_t, (B,), jnp.float32, minval=0.0, maxval=100.0)
    feats = reference_sinusoidal(t, in_channels)
    ref_fused = reference_mlp(feats, w1, b1, w2, b2)
    out_fused = jax.block_until_ready(
        timesteps_embedding_fused(t, w1, b1, w2, b2, mxu_dtype=jnp.float32))
    assert out_fused.shape == (B, out_dim)
    assert jnp.allclose(out_fused, ref_fused, atol=5e-3, rtol=5e-3), "fused kernel mismatch"

    print("KERNEL_OK")
</pallas_src>

<mosaic_0001>
module attributes {stable_mosaic.version = 11 : i64} {
  func.func @_timestep_embedding_kernel(%arg0: i32, %arg1: memref<8x32xf32, #tpu.memory_space<vmem>>, %arg2: memref<32x128xf32, #tpu.memory_space<vmem>>, %arg3: memref<1x128xf32, #tpu.memory_space<vmem>>, %arg4: memref<128x128xf32, #tpu.memory_space<vmem>>, %arg5: memref<1x128xf32, #tpu.memory_space<vmem>>, %arg6: memref<8x128xf32, #tpu.memory_space<vmem>>) attributes {dimension_semantics = [#tpu.dimension_semantics<parallel>], iteration_bounds = array<i64: 1>, scalar_prefetch = 0 : i64, scratch_operands = 0 : i64, tpu.core_type = #tpu.core_type<tc>, window_params = [{transform_indices = @transform_0, window_bounds = array<i64: 8, 32>}, {pipeline_mode = #tpu.pipeline_mode<synchronous>, transform_indices = @transform_1, window_bounds = array<i64: 32, 128>}, {pipeline_mode = #tpu.pipeline_mode<synchronous>, transform_indices = @transform_2, window_bounds = array<i64: 1, 128>}, {pipeline_mode = #tpu.pipeline_mode<synchronous>, transform_indices = @transform_3, window_bounds = array<i64: 128, 128>}, {pipeline_mode = #tpu.pipeline_mode<synchronous>, transform_indices = @transform_4, window_bounds = array<i64: 1, 128>}, {transform_indices = @transform_5, window_bounds = array<i64: 8, 128>}]} {
    %c0 = arith.constant 0 : index
    %c0_0 = arith.constant 0 : index
    %0 = vector.load %arg1[%c0, %c0_0] : memref<8x32xf32, #tpu.memory_space<vmem>>, vector<8x32xf32>
    %c0_1 = arith.constant 0 : index
    %c0_2 = arith.constant 0 : index
    %1 = vector.load %arg2[%c0_1, %c0_2] : memref<32x128xf32, #tpu.memory_space<vmem>>, vector<32x128xf32>
    %cst = arith.constant dense<0.000000e+00> : vector<8x128xf32>
    %2 = tpu.matmul %0, %1, %cst {dimension_numbers = #tpu.dot_dimension_numbers<[1], [0], [0], [1], [0, 0, 1, 1], [], []>} : vector<8x32xf32>, vector<32x128xf32>, vector<8x128xf32> -> vector<8x128xf32>
    %c0_3 = arith.constant 0 : index
    %c0_4 = arith.constant 0 : index
    %3 = vector.load %arg3[%c0_3, %c0_4] : memref<1x128xf32, #tpu.memory_space<vmem>>, vector<1x128xf32>
    %4 = vector.broadcast %3 : vector<1x128xf32> to vector<8x128xf32>
    %5 = arith.addf %2, %4 : vector<8x128xf32>
    %6 = arith.negf %5 : vector<8x128xf32>
    %7 = math.exp %6 : vector<8x128xf32>
    %cst_5 = arith.constant 1.000000e+00 : f32
    %8 = vector.broadcast %cst_5 : f32 to vector<8x128xf32>
    %9 = arith.addf %8, %7 : vector<8x128xf32>
    %10 = arith.divf %8, %9 : vector<8x128xf32>
    %11 = arith.mulf %5, %10 : vector<8x128xf32>
    %c0_6 = arith.constant 0 : index
    %c0_7 = arith.constant 0 : index
    %12 = vector.load %arg4[%c0_6, %c0_7] : memref<128x128xf32, #tpu.memory_space<vmem>>, vector<128x128xf32>
    %cst_8 = arith.constant dense<0.000000e+00> : vector<8x128xf32>
    %13 = tpu.matmul %11, %12, %cst_8 {dimension_numbers = #tpu.dot_dimension_numbers<[1], [0], [0], [1], [0, 0, 1, 1], [], []>} : vector<8x128xf32>, vector<128x128xf32>, vector<8x128xf32> -> vector<8x128xf32>
    %c0_9 = arith.constant 0 : index
    %c0_10 = arith.constant 0 : index
    %14 = vector.load %arg5[%c0_9, %c0_10] : memref<1x128xf32, #tpu.memory_space<vmem>>, vector<1x128xf32>
    %15 = vector.broadcast %14 : vector<1x128xf32> to vector<8x128xf32>
    %16 = arith.addf %13, %15 : vector<8x128xf32>
    %c0_11 = arith.constant 0 : index
    %c0_12 = arith.constant 0 : index
    %17 = vector.load %arg6[%c0_11, %c0_12] : memref<8x128xf32, #tpu.memory_space<vmem>>, vector<8x128xf32>
    tpu.vector_store %arg6[%c0_11, %c0_12], %16 {strides = array<i32>} : memref<8x128xf32, #tpu.memory_space<vmem>>, vector<8x128xf32>,
    return
  }
  func.func @transform_0(%arg0: i32) -> (i32, i32) {
    %c0_i32 = arith.constant 0 : i32
    %c0_i32_0 = arith.constant 0 : i32
    return %arg0, %c0_i32 : i32, i32
  }
  func.func @transform_1(%arg0: i32) -> (i32, i32) {
    %c0_i32 = arith.constant 0 : i32
    %c0_i32_0 = arith.constant 0 : i32
    %c0_i32_1 = arith.constant 0 : i32
    return %c0_i32, %c0_i32_0 : i32, i32
  }
  func.func @transform_2(%arg0: i32) -> (i32, i32) {
    %c0_i32 = arith.constant 0 : i32
    %c0_i32_0 = arith.constant 0 : i32
    %c0_i32_1 = arith.constant 0 : i32
    return %c0_i32, %c0_i32_0 : i32, i32
  }
  func.func @transform_3(%arg0: i32) -> (i32, i32) {
    %c0_i32 = arith.constant 0 : i32
    %c0_i32_0 = arith.constant 0 : i32
    %c0_i32_1 = arith.constant 0 : i32
    return %c0_i32, %c0_i32_0 : i32, i32
  }
  func.func @transform_4(%arg0: i32) -> (i32, i32) {
    %c0_i32 = arith.constant 0 : i32
    %c0_i32_0 = arith.constant 0 : i32
    %c0_i32_1 = arith.constant 0 : i32
    return %c0_i32, %c0_i32_0 : i32, i32
  }
  func.func @transform_5(%arg0: i32) -> (i32, i32) {
    %c0_i32 = arith.constant 0 : i32
    %c0_i32_0 = arith.constant 0 : i32
    return %arg0, %c0_i32 : i32, i32
  }
}

</mosaic_0001>

<llo_original>
// kernel: tpu_custom_call.1
$region0: #{tpu_custom_call.1}
  #allocation0 [shape = 'u32[]', space=smem, size = 0x4, offset = 0x4, fixed_abs, tag = 'smem constant byte address 0x4 - core index']
  #allocation1 [shape = 'u32[72,128]{1,0:T(1,128)}', space=vmem, size = 0x9000, scoped, tag = 'internal scratch']
  %s0 = inlined_call_operand.hbm [shape: f32[8,32], index: 0, kind: input, shape index: {}]
  %s1 = inlined_call_operand.hbm [shape: f32[32,128], index: 1, kind: input, shape index: {}]
  %s2 = inlined_call_operand.vmem [shape: f32[1,128], index: 2, kind: input, shape index: {}]
  %s3 = inlined_call_operand.hbm [shape: f32[128,128], index: 3, kind: input, shape index: {}]
  %s4 = inlined_call_operand.vmem [shape: f32[1,128], index: 4, kind: input, shape index: {}]
  %s5 = inlined_call_operand.hbm [shape: f32[8,128], index: 5, kind: output, shape index: {}]
  %s6 = sld [smem:[#allocation0]]
  $region42: #{tpu_custom_call.1} parent=0
    _
  %s8 = ssub.s32 1, %s6
  %s9 = scalar_select 0, %s8, %s6
  $region1: #{tpu_custom_call.1} parent=0
    #allocation2 [shape = 'u8[4096]{0}', space=vmem, size = 0x1000, scoped, tag = 'input window, operand 0, single buffered']
    #allocation3 [shape = 's32[1]{0}', space=sflag, size = 0x4, scoped, tag = 'scoped memory for tpu_custom_call.1']
    #allocation4 [shape = 's32[1]{0}', space=sflag, size = 0x4, scoped, tag = 'scoped memory for tpu_custom_call.1']
    #allocation5 [shape = 'u8[16384]{0}', space=vmem, size = 0x4000, scoped, tag = 'input window, operand 1, single buffered']
    #allocation6 [shape = 's32[1]{0}', space=sflag, size = 0x4, scoped, tag = 'scoped memory for tpu_custom_call.1']
    #allocation7 [shape = 'u8[65536]{0}', space=vmem, size = 0x10000, scoped, tag = 'input window, operand 3, single buffered']
    #allocation8 [shape = 'u8[4096]{0}', space=vmem, size = 0x1000, scoped, tag = 'output window, operand 0, single buffered']
    %10 = vsyncpa [#allocation3], 0
    %11 = vsyncpa [#allocation6], 0
    %12 = vsyncpa [#allocation4], 0
    // Predicated region
    $region2: #{tpu_custom_call.1} parent=1 // pred_check
      _
    $region3: #{tpu_custom_call.1} parent=1 // pred_check_branch
      %14 = sbr.rel (0) target = $region5
    $region4: #{tpu_custom_call.1} parent=1 // pred_region
      %16 = vsyncadd [#allocation3], 0
      %s18 = sshll.u32 %s0, 4
      %s19 = int_to_ptr.hbm [resolvable:$true] %s18
      %s20 = sshll.u32 [#allocation2], 4
      %s21 = int_to_ptr.vmem [resolvable:$true] %s20
      %23 = dma.hbm_to_vmem [thread:$0]  %s19, 128, %s21, [#allocation3]
    $region5: #{tpu_custom_call.1} parent=1 // pred_fallthru
      _
    // Predicated region
    $region6: #{tpu_custom_call.1} parent=1 // pred_check
      _
    $region7: #{tpu_custom_call.1} parent=1 // pred_check_branch
      %25 = sbr.rel (0) target = $region9
    $region8: #{tpu_custom_call.1} parent=1 // pred_region
      %27 = vsyncadd [#allocation6], 0
      %s28 = sshll.u32 %s1, 4
      %s29 = int_to_ptr.hbm [resolvable:$true] %s28
      %s30 = sshll.u32 [#allocation5], 4
      %s31 = int_to_ptr.vmem [resolvable:$true] %s30
      %36 = dma.hbm_to_vmem [thread:$0]  %s29, 512, %s31, [#allocation6], 128, 128, 8
    $region9: #{tpu_custom_call.1} parent=1 // pred_fallthru
      _
    // Predicated region
    $region10: #{tpu_custom_call.1} parent=1 // pred_check
      _
    $region11: #{tpu_custom_call.1} parent=1 // pred_check_branch
      %38 = sbr.rel (0) target = $region13
    $region12: #{tpu_custom_call.1} parent=1 // pred_region
      _
    $region13: #{tpu_custom_call.1} parent=1 // pred_fallthru
      _
    // Predicated region
    $region14: #{tpu_custom_call.1} parent=1 // pred_check
      _
    $region15: #{tpu_custom_call.1} parent=1 // pred_check_branch
      %40 = sbr.rel (0) target = $region17
    $region16: #{tpu_custom_call.1} parent=1 // pred_region
      %42 = vsyncadd [#allocation6], 0
      %s43 = sshll.u32 %s3, 4
      %s44 = int_to_ptr.hbm [resolvable:$true] %s43
      %s45 = sshll.u32 [#allocation7], 4
      %s46 = int_to_ptr.vmem [resolvable:$true] %s45
      %51 = dma.hbm_to_vmem [thread:$0]  %s44, 2048, %s46, [#allocation6], 128, 128, 8
    $region17: #{tpu_custom_call.1} parent=1 // pred_fallthru
      _
    // Predicated region
    $region18: #{tpu_custom_call.1} parent=1 // pred_check
      _
    $region19: #{tpu_custom_call.1} parent=1 // pred_check_branch
      %53 = sbr.rel (0) target = $region21
    $region20: #{tpu_custom_call.1} parent=1 // pred_region
      _
    $region21: #{tpu_custom_call.1} parent=1 // pred_fallthru
      _
    // Predicated region
    $region22: #{tpu_custom_call.1} parent=1 // pred_check
      _
    $region23: #{tpu_custom_call.1} parent=1 // pred_check_branch
      %55 = sbr.rel (0) target = $region25
    $region24: #{tpu_custom_call.1} parent=1 // pred_region
      %57 = dma.done [#allocation3], 128
    $region25: #{tpu_custom_call.1} parent=1 // pred_fallthru
      _
    // Predicated region
    $region26: #{tpu_custom_call.1} parent=1 // pred_check
      _
    $region27: #{tpu_custom_call.1} parent=1 // pred_check_branch
      %59 = sbr.rel (0) target = $region29
    $region28: #{tpu_custom_call.1} parent=1 // pred_region
      %61 = dma.done [#allocation6], 512
    $region29: #{tpu_custom_call.1} parent=1 // pred_fallthru
      _
    // Predicated region
    $region30: #{tpu_custom_call.1} parent=1 // pred_check
      _
    $region31: #{tpu_custom_call.1} parent=1 // pred_check_branch
      %63 = sbr.rel (0) target = $region33
    $region32: #{tpu_custom_call.1} parent=1 // pred_region
      %65 = dma.done [#allocation6], 2048
    $region33: #{tpu_custom_call.1} parent=1 // pred_fallthru
      _
    %v66 = vld [vmem:[#allocation2] sm:$0xff]
    %v67 = vld [vmem:[#allocation5] sm:$0xff]
    %v68 = vld [vmem:[#allocation5 + $0x8] sm:$0xff]
    %v69 = vld [vmem:[#allocation5 + $0x10] sm:$0xff]
    %v70 = vld [vmem:[#allocation5 + $0x18] sm:$0xff]
    %v71 = vld [vmem:[%s2] sm:$0x1]
    %v73 = vperm.slane %v71, 0
    %vm75 = vcmask 261120
    %v77 = vsel %vm75, %v66, 0
    %79 = vmatpush.msra.mxu0 0.0
    %80 = vmatpush.msra.mxu0 0.0
    %81 = vmatpush.msra.mxu0 0.0
    %82 = vmatpush.msra.mxu0 0.0
    %83 = vmatpush.msra.mxu0 0.0
    %84 = vmatpush.msra.mxu0 0.0
    %85 = vmatpush.msra.mxu0 0.0
    %86 = vmatpush.msra.mxu0 0.0
    %87 = vmatpush.msra.mxu0 0.0
    %88 = vmatpush.msra.mxu0 0.0
    %89 = vmatpush.msra.mxu0 0.0
    %90 = vmatpush.msra.mxu0 0.0
    %91 = vmatpush.msra.mxu0 %v70
    %92 = vmatpush.msra.mxu0 %v69
    %93 = vmatpush.msra.mxu0 %v68
    %94 = vmatpush.msra.mxu0 %v67
    %95 = vmatmul.f32.gmra.mxu0 %v77
    %v96 = vpop.f32.mrf.mxu0
    %v97 = vadd.f32 %v73, %v96
    %98 = vdwg.mxu0
    %v99 = vxor.u32 %v97, 2147483648
    %v100 = vmul.f32 %v99, 1.442695
    %v101 = vpow.pop %v100
    %v102 = vadd.f32 %v101, 1.0
    %v103 = vrcp.pop %v102
    %v104 = vmul.f32 %v102, %v103
    %v105 = vsub.f32 1.0, %v104
    %v106 = vmul.f32 %v103, %v105
    %v107 = vadd.f32 %v103, %v106
    %vm108 = vweird.f32 %v102
    %vm109 = vweird.f32 %v103
    %vm110 = vmor %vm108, %vm109
    %v111 = vsel %vm110, %v103, %v107
    %v112 = vand.u32 2147483647, %v102
    %vm113 = vcmp.eq.f32.partialorder %v112, 8.507059e+37
    %v114 = vand.u32 %v102, 2147483648
    %v115 = vor.u32 1.1754944e-38, %v114
    %v116 = vsel %vm113, %v115, %v111
    %v117 = vmul.f32 1.0, %v116
    %v118 = vmul.f32 %v97, %v117
    %v119 = vld [vmem:[#allocation7] sm:$0xff]
    %v120 = vld [vmem:[#allocation7 + $0x8] sm:$0xff]
    %v121 = vld [vmem:[#allocation7 + $0x10] sm:$0xff]
    %v122 = vld [vmem:[#allocation7 + $0x18] sm:$0xff]
    %v123 = vld [vmem:[#allocation7 + $0x20] sm:$0xff]
    %v124 = vld [vmem:[#allocation7 + $0x28] sm:$0xff]
    %v125 = vld [vmem:[#allocation7 + $0x30] sm:$0xff]
    %v126 = vld [vmem:[#allocation7 + $0x38] sm:$0xff]
    %v127 = vld [vmem:[#allocation7 + $0x40] sm:$0xff]
    %v128 = vld [vmem:[#allocation7 + $0x48] sm:$0xff]
    %v129 = vld [vmem:[#allocation7 + $0x50] sm:$0xff]
    %v130 = vld [vmem:[#allocation7 + $0x58] sm:$0xff]
    %v131 = vld [vmem:[#allocation7 + $0x60] sm:$0xff]
    %v132 = vld [vmem:[#allocation7 + $0x68] sm:$0xff]
    %v133 = vld [vmem:[#allocation7 + $0x70] sm:$0xff]
    %v134 = vld [vmem:[#allocation7 + $0x78] sm:$0xff]
    %v135 = vld [vmem:[%s4] sm:$0x1]
    %v137 = vperm.slane %v135, 0
    %139 = vmatpush.msra.mxu0 %v134
    %140 = vmatpush.msra.mxu0 %v133
    %141 = vmatpush.msra.mxu0 %v132
    %142 = vmatpush.msra.mxu0 %v131
    %143 = vmatpush.msra.mxu0 %v130
    %144 = vmatpush.msra.mxu0 %v129
    %145 = vmatpush.msra.mxu0 %v128
    %146 = vmatpush.msra.mxu0 %v127
    %147 = vmatpush.msra.mxu0 %v126
    %148 = vmatpush.msra.mxu0 %v125
    %149 = vmatpush.msra.mxu0 %v124
    %150 = vmatpush.msra.mxu0 %v123
    %151 = vmatpush.msra.mxu0 %v122
    %152 = vmatpush.msra.mxu0 %v121
    %153 = vmatpush.msra.mxu0 %v120
    %154 = vmatpush.msra.mxu0 %v119
    %155 = vmatmul.f32.gmra.mxu0 %v118
    %v156 = vpop.f32.mrf.mxu0
    %v157 = vadd.f32 %v137, %v156
    %158 = vdwg.mxu0
    %159 = vst [vmem:[#allocation8] sm:$0xff] %v157
    // Predicated region
    $region34: #{tpu_custom_call.1} parent=1 // pred_check
      _
    $region35: #{tpu_custom_call.1} parent=1 // pred_check_branch
      %161 = sbr.rel (0) target = $region37
    $region36: #{tpu_custom_call.1} parent=1 // pred_region
      %163 = vsyncadd [#allocation4], 0
      %s165 = sshll.u32 [#allocation8], 4
      %s166 = int_to_ptr.vmem [resolvable:$true] %s165
      %s167 = sshll.u32 %s5, 4
      %s168 = int_to_ptr.hbm [resolvable:$true] %s167
      %170 = dma.vmem_to_hbm [thread:$0]  %s166, 128, %s168, [#allocation4]
    $region37: #{tpu_custom_call.1} parent=1 // pred_fallthru
      _
    // Predicated region
    $region38: #{tpu_custom_call.1} parent=1 // pred_check
      _
    $region39: #{tpu_custom_call.1} parent=1 // pred_check_branch
      %172 = sbr.rel (0) target = $region41
    $region40: #{tpu_custom_call.1} parent=1 // pred_region
      %174 = dma.done [#allocation4], 128
    $region41: #{tpu_custom_call.1} parent=1 // pred_fallthru
      _
    %175 = vsyncpa [#allocation3], 1
    %176 = vsyncpa [#allocation6], 1
    %177 = vsyncpa [#allocation4], 1

</llo_original>
